<compile_context>
chip_gen: v7x
topology: tpu7x:2x2x1
jax: 0.10.0
libtpu: 0.0.40
codegen_flags: <defaults>
</compile_context>

<pallas_src>
import jax
import jax.numpy as jnp
from jax.experimental import pallas as pl
from jax.experimental.pallas import tpu as pltpu

LANES = 128    # TPU vreg lane width
SUBLANES = 8   # TPU vreg sublane count (f32)

# Model constants (M = 2500.0 and Lf = 1.5 are defined in the PyTorch module
# but unused by the forward pass; kept out of the kernels as dead code).
_LR = 1.5
_L = 3.0


def kinetic_scalar_kernel(sa_ref, out_ref):
    """Single-state forward pass.

    sa_ref : SMEM (5,) f32  -> scalar loads, no input DMA, no XLU reductions.
    out_ref: VMEM (1, 128) f32 lane-dense row; lanes 0..2 = [dx, dy, dhead].
    """
    head = sa_ref[2]
    v = sa_ref[3]
    delta = sa_ref[4]

    beta = (_LR / _L) * delta          # scalar
    gamma = (v / _L) * delta           # scalar
    angle = head + beta                # scalar

    # Broadcast once; transcendentals run on the vector (EUP) path.
    angle_vec = jnp.broadcast_to(angle, (1, LANES)).astype(jnp.float32)
    dx_vec = v * jnp.cos(angle_vec)
    dy_vec = v * jnp.sin(angle_vec)

    lane = jax.lax.broadcasted_iota(jnp.int32, (1, LANES), 1)
    out_ref[...] = jnp.where(lane == 0, dx_vec,
                   jnp.where(lane == 1, dy_vec,
                   jnp.where(lane == 2, gamma, 0.0)))


def kinetic_batched_kernel(sa_ref, out_ref):
    """Batched forward pass: features on sublanes, batch on lanes.

    sa_ref : VMEM (8, TB) f32, rows 0..4 = [x, y, head, v, delta] (rows 5..7 pad).
    out_ref: VMEM (8, TB) f32, rows 0..2 = [dx, dy, dhead] (rows 3..7 zero).
    """
    head = sa_ref[2:3, :]
    v = sa_ref[3:4, :]
    delta = sa_ref[4:5, :]

    beta = (_LR / _L) * delta
    gamma = (v / _L) * delta
    dx = v * jnp.cos(head + beta)
    dy = v * jnp.sin(head + beta)

    sub = jax.lax.broadcasted_iota(jnp.int32, out_ref.shape, 0)
    out_ref[...] = jnp.where(sub == 0, dx,
                   jnp.where(sub == 1, dy,
                   jnp.where(sub == 2, gamma, 0.0)))


def kinetic_model(state_action):
    """Pallas equivalent of KineticModel.forward for one state. Returns (3,) f32."""
    state_action = state_action.astype(jnp.float32)
    assert state_action.ndim == 1 and state_action.shape[0] >= 5

    out_row = pl.pallas_call(
        kinetic_scalar_kernel,
        out_shape=jax.ShapeDtypeStruct((1, LANES), jnp.float32),
        in_specs=[pl.BlockSpec(memory_space=pltpu.MemorySpace.SMEM)],
        out_specs=pl.BlockSpec((1, LANES), lambda: (0, 0)),
    )(state_action)
    return out_row[0, :3]


def kinetic_model_batched(states, *, lane_tile=512):
    """Batched forward pass: (B, >=5) -> (B, 3)."""
    states = states.astype(jnp.float32)
    assert states.ndim == 2 and states.shape[1] >= 5
    B = states.shape[0]

    b_pad = max(lane_tile, pl.cdiv(B, lane_tile) * lane_tile)
    # Layout plumbing: features onto sublanes (padded to 8), batch onto lanes.
    sa = jnp.zeros((SUBLANES, b_pad), jnp.float32).at[:5, :B].set(states[:, :5].T)

    out = pl.pallas_call(
        kinetic_batched_kernel,
        out_shape=jax.ShapeDtypeStruct((SUBLANES, b_pad), jnp.float32),
        grid=(b_pad // lane_tile,),
        in_specs=[pl.BlockSpec((SUBLANES, lane_tile), lambda i: (0, i))],
        out_specs=pl.BlockSpec((SUBLANES, lane_tile), lambda i: (0, i)),
        compiler_params=pltpu.CompilerParams(
            dimension_semantics=("parallel",)),  # uses both TCs on v7x
    )(sa)
    return out[:3, :B].T


def kinetic_model_ref(state_action):
    """Plain-JAX reference for correctness checking (and the fastest B=1 path)."""
    head = state_action[2]
    v = state_action[3]
    delta = state_action[4]
    beta = _LR / _L * delta
    gamma = v / _L * delta
    return jnp.stack([v * jnp.cos(head + beta),
                      v * jnp.sin(head + beta),
                      gamma])


if __name__ == "__main__":
    key = jax.random.PRNGKey(0)
    k1, k2 = jax.random.split(key)

    # Single state_action = [x, y, head, v, delta]
    state_action = jax.random.normal(k1, (5,), dtype=jnp.float32)
    out = jax.block_until_ready(kinetic_model(state_action))
    ref = kinetic_model_ref(state_action)
    assert out.shape == (3,)
    assert jnp.allclose(out, ref, atol=1e-5, rtol=1e-5), (out, ref)

    # Batched path (amortizes pallas_call / per-step overhead across states).
    states = jax.random.normal(k2, (8, 5), dtype=jnp.float32)
    out_b = jax.block_until_ready(kinetic_model_batched(states, lane_tile=128))
    ref_b = jax.vmap(kinetic_model_ref)(states)
    assert out_b.shape == (8, 3)
    assert jnp.allclose(out_b, ref_b, atol=1e-5, rtol=1e-5), (out_b, ref_b)

    print("KERNEL_OK")
</pallas_src>

<mosaic_0001>
module attributes {stable_mosaic.version = 11 : i64} {
  func.func @kinetic_scalar_kernel(%arg0: memref<5xf32, #tpu.memory_space<smem>>, %arg1: memref<1x128xf32, #tpu.memory_space<vmem>>) attributes {dimension_semantics = [], scalar_prefetch = 0 : i64, scratch_operands = 0 : i64, tpu.core_type = #tpu.core_type<tc>} {
    %c2 = arith.constant 2 : index
    %0 = memref.load %arg0[%c2] : memref<5xf32, #tpu.memory_space<smem>>
    %c3 = arith.constant 3 : index
    %1 = memref.load %arg0[%c3] : memref<5xf32, #tpu.memory_space<smem>>
    %c4 = arith.constant 4 : index
    %2 = memref.load %arg0[%c4] : memref<5xf32, #tpu.memory_space<smem>>
    %cst = arith.constant 5.000000e-01 : f32
    %3 = arith.mulf %cst, %2 : f32
    %cst_0 = arith.constant 3.000000e+00 : f32
    %4 = arith.divf %1, %cst_0 : f32
    %5 = arith.mulf %4, %2 : f32
    %6 = arith.addf %0, %3 : f32
    %7 = vector.broadcast %6 : f32 to vector<1x128xf32>
    %8 = math.cos %7 : vector<1x128xf32>
    %9 = vector.broadcast %1 : f32 to vector<1x128xf32>
    %10 = arith.mulf %9, %8 : vector<1x128xf32>
    %11 = math.sin %7 : vector<1x128xf32>
    %12 = vector.broadcast %1 : f32 to vector<1x128xf32>
    %13 = arith.mulf %12, %11 : vector<1x128xf32>
    %14 = tpu.iota {dimensions = array<i32: 1>} : vector<1x128xi32>
    %c0_i32 = arith.constant 0 : i32
    %15 = vector.broadcast %c0_i32 : i32 to vector<1x128xi32>
    %16 = arith.cmpi eq, %14, %15 : vector<1x128xi32>
    %c1_i32 = arith.constant 1 : i32
    %17 = vector.broadcast %c1_i32 : i32 to vector<1x128xi32>
    %18 = arith.cmpi eq, %14, %17 : vector<1x128xi32>
    %c2_i32 = arith.constant 2 : i32
    %19 = vector.broadcast %c2_i32 : i32 to vector<1x128xi32>
    %20 = arith.cmpi eq, %14, %19 : vector<1x128xi32>
    %cst_1 = arith.constant 0.000000e+00 : f32
    %21 = vector.broadcast %5 : f32 to vector<1x128xf32>
    %22 = vector.broadcast %cst_1 : f32 to vector<1x128xf32>
    %23 = arith.select %20, %21, %22 : vector<1x128xi1>, vector<1x128xf32>
    %24 = arith.select %18, %13, %23 : vector<1x128xi1>, vector<1x128xf32>
    %25 = arith.select %16, %10, %24 : vector<1x128xi1>, vector<1x128xf32>
    %c0 = arith.constant 0 : index
    %c0_2 = arith.constant 0 : index
    %26 = vector.load %arg1[%c0, %c0_2] : memref<1x128xf32, #tpu.memory_space<vmem>>, vector<1x128xf32>
    tpu.vector_store %arg1[%c0, %c0_2], %25 {strides = array<i32>} : memref<1x128xf32, #tpu.memory_space<vmem>>, vector<1x128xf32>,
    return
  }
}

</mosaic_0001>

<llo_original>
// kernel: tpu_custom_call.1
$region0: #{tpu_custom_call.1}
  #allocation0 [shape = 'u32[]', space=smem, size = 0x4, offset = 0x4, fixed_abs, tag = 'smem constant byte address 0x4 - core index']
  #allocation1 [shape = 'u32[144,128]{1,0:T(1,128)}', space=vmem, size = 0x12000, scoped, tag = 'internal scratch']
  %s0 = inlined_call_operand.hbm [shape: f32[5], index: 0, kind: input, shape index: {}]
  %s1 = inlined_call_operand.hbm [shape: f32[1,128], index: 1, kind: output, shape index: {}]
  %s2 = sld [smem:[#allocation0]]
  $region18: #{tpu_custom_call.1} parent=0
    _
  %s4 = ssub.s32 1, %s2
  %s5 = scalar_select 0, %s4, %s2
  $region1: #{tpu_custom_call.1} parent=0
    #allocation2 [shape = 'u8[512]{0}', space=smem, size = 0x200, scoped, tag = 'input window, operand 0, single buffered']
    #allocation3 [shape = 's32[1]{0}', space=sflag, size = 0x4, scoped, tag = 'scoped memory for tpu_custom_call.1']
    #allocation4 [shape = 's32[1]{0}', space=sflag, size = 0x4, scoped, tag = 'scoped memory for tpu_custom_call.1']
    #allocation5 [shape = 'u8[512]{0}', space=vmem, size = 0x400, scoped, tag = 'output window, operand 0, single buffered']
    %6 = vsyncpa [#allocation4], 0
    %7 = vsyncpa [#allocation3], 0
    // Predicated region
    $region2: #{tpu_custom_call.1} parent=1 // pred_check
      _
    $region3: #{tpu_custom_call.1} parent=1 // pred_check_branch
      %9 = sbr.rel (0) target = $region5
    $region4: #{tpu_custom_call.1} parent=1 // pred_region
      %s11 = ssub.s32 16, 16
      %12 = vsyncadd [#allocation4], %s11
      %15 = dma.hbm_to_smem %s0, 16, [#allocation2], [#allocation4]
    $region5: #{tpu_custom_call.1} parent=1 // pred_fallthru
      _
    // Predicated region
    $region6: #{tpu_custom_call.1} parent=1 // pred_check
      _
    $region7: #{tpu_custom_call.1} parent=1 // pred_check_branch
      %17 = sbr.rel (0) target = $region9
    $region8: #{tpu_custom_call.1} parent=1 // pred_region
      %18 = dma.done [#allocation4], 16
    $region9: #{tpu_custom_call.1} parent=1 // pred_fallthru
      _
    %19 = sfence
    %s20 = sld [smem:[#allocation2 + $0x2]]
    %s21 = sld [smem:[#allocation2 + $0x3]]
    %s22 = sld [smem:[#allocation2 + $0x4]]
    %s23 = smul.f32 %s22, 0.5
    %v24 = vrcp.pop 3.0
    %s25 = vtos %v24
    %s26 = smul.f32 %s21, %s25
    %s27 = smul.f32 %s26, %s22
    %s28 = sadd.f32 %s20, %s23
    %v29 = vstv %s28
    %v30 = vand.u32 2147483647, %v29
    %vm31 = vcmp.le.f32.partialorder %v30, 0.7853982
    %vm32 = vcmp.lt.s32.totalorder %v29, 0
    %v33 = vand.u32 %v29, 2139095040
    %v34 = vshrl.u32 %v33, 23
    %v35 = vsub.s32 %v34, 127
    %v36 = vand.u32 2147483647, %v29
    %v37 = vand.u32 %v36, 8388607
    %v38 = vor.u32 %v37, 8388608
    %v39 = vsub.s32 0, %v38
    %v40 = vadd.s32 %v35, 1
    %vm41 = vcmp.gt.s32.totalorder %v40, 0
    %v42 = vsel %vm41, %v40, 0
    %v43 = vshrl.u32 %v42, 5
    %v44 = vand.u32 %v42, 31
    %v45 = vsub.s32 32, %v44
    %v46 = vshrl.u32 683565275, %v45
    %v47 = vshll.u32 683565275, %v44
    %v48 = vshrl.u32 2475754826, %v45
    %v49 = vor.u32 %v47, %v48
    %v50 = vshll.u32 2475754826, %v44
    %v51 = vshrl.u32 2131351028, %v45
    %v52 = vor.u32 %v50, %v51
    %v53 = vshll.u32 2131351028, %v44
    %v54 = vshrl.u32 2102212464, %v45
    %v55 = vor.u32 %v53, %v54
    %v56 = vshll.u32 2102212464, %v44
    %v57 = vshrl.u32 920167782, %v45
    %v58 = vor.u32 %v56, %v57
    %v59 = vshll.u32 920167782, %v44
    %v60 = vshrl.u32 1326507024, %v45
    %v61 = vor.u32 %v59, %v60
    %vm62 = vcmp.lt.s32.totalorder %v43, 1
    %vm63 = vcmp.lt.s32.totalorder %v43, 2
    %vm64 = vcmp.lt.s32.totalorder %v43, 3
    %vm65 = vcmp.lt.s32.totalorder %v43, 4
    %v66 = vsel %vm62, %v46, %v49
    %v67 = vsel %vm65, %v55, 2102212464
    %v68 = vsel %vm64, %v52, %v67
    %v69 = vsel %vm63, %v66, %v68
    %v70 = vsel %vm62, %v49, %v52
    %v71 = vsel %vm65, %v58, 920167782
    %v72 = vsel %vm64, %v55, %v71
    %v73 = vsel %vm63, %v70, %v72
    %v74 = vsel %vm62, %v52, %v55
    %v75 = vsel %vm65, %v61, 1326507024
    %v76 = vsel %vm64, %v58, %v75
    %v77 = vsel %vm63, %v74, %v76
    %v78 = vshll.u32 %v38, 8
    %v79 = vmul.u32.u64.compose %v78, %v77
    %v80 = vextract.low.u32 %v79
    %v81 = vextract.high.u32 %v79
    %v82 = vmul.u32.u64.compose %v78, %v73
    %v83 = vextract.low.u32 %v82
    %v84 = vextract.high.u32 %v82
    %v85 = vmul.u32 %v78, %v69
    %v86 = vadd.s32 %v81, %v83
    %vm87 = vc.u32 %v81, %v83
    %v88 = vadd.s32 %v84, 1
    %v89 = vsel %vm87, %v88, %v84
    %v90 = vadd.s32 %v85, %v89
    %v91 = vadd.s32 %v90, 536870912
    %v92 = vshrl.u32 %v91, 30
    %v93 = vshll.u32 %v92, 30
    %v94 = vsub.s32 %v90, %v93
    %vm95 = vcmp.lt.s32.totalorder %v94, 0
    %v96 = vsub.s32 0, %v94
    %v97 = vsel %vm95, %v96, %v94
    %v98 = vclz %v97
    %v99 = vsub.s32 %v98, 2
    %vm100 = vcmp.gt.s32.totalorder 0, %v99
    %v101 = vsel %vm100, 0, %v99
    %v102 = vsub.s32 32, %v101
    %v103 = vshll.u32 %v94, %v101
    %v104 = vshrl.u32 %v86, %v102
    %v105 = vor.u32 %v103, %v104
    %v106 = vsub.s32 4294967266, %v101
    %v107 = vadd.s32 %v106, 127
    %v108 = vshll.u32 %v107, 23
    %v109 = vor.u32 4788187, %v108
    %v110 = vand.u32 2147483647, %v109
    %v112 = vcvt.s32.f32 %v105
    %v113 = vmul.f32 %v112, %v110
    %v114 = vxor.u32 %v113, 2147483648
    %v115 = vsel %vm32, %v114, %v113
    %v116 = vsub.s32 4, %v92
    %v117 = vsel %vm32, %v116, %v92
    %v118 = vsel %vm31, %v29, %v115
    %v119 = vsel %vm31, 0, %v117
    %v120 = vcosq.f32.pop %v118
    %v121 = vsinq.f32.pop %v118
    %vm122 = vweird.f32 %v29
    %v123 = vand.u32 %v119, 3
    %vm124 = vcmp.lt.s32.totalorder %v123, 2
    %vm125 = vcmp.eq.s32.totalorder %v123, 0
    %v126 = vxor.u32 %v121, 2147483648
    %v127 = vsel %vm125, %v120, %v126
    %vm128 = vcmp.eq.s32.totalorder %v123, 2
    %v129 = vxor.u32 %v120, 2147483648
    %v130 = vsel %vm128, %v129, %v121
    %v131 = vsel %vm124, %v127, %v130
    %v132 = vsel %vm122, nan, %v131
    %v133 = vstv %s21
    %v134 = vmul.f32 %v133, %v132
    %v135 = vand.u32 2147483647, %v29
    %vm136 = vcmp.le.f32.partialorder %v135, 0.7853982
    %vm137 = vcmp.lt.s32.totalorder %v29, 0
    %v138 = vand.u32 %v29, 2139095040
    %v139 = vshrl.u32 %v138, 23
    %v140 = vsub.s32 %v139, 127
    %v141 = vand.u32 2147483647, %v29
    %v142 = vand.u32 %v141, 8388607
    %v143 = vor.u32 %v142, 8388608
    %v144 = vsub.s32 0, %v143
    %v145 = vadd.s32 %v140, 1
    %vm146 = vcmp.gt.s32.totalorder %v145, 0
    %v147 = vsel %vm146, %v145, 0
    %v148 = vshrl.u32 %v147, 5
    %v149 = vand.u32 %v147, 31
    %v150 = vsub.s32 32, %v149
    %v151 = vshrl.u32 683565275, %v150
    %v152 = vshll.u32 683565275, %v149
    %v153 = vshrl.u32 2475754826, %v150
    %v154 = vor.u32 %v152, %v153
    %v155 = vshll.u32 2475754826, %v149
    %v156 = vshrl.u32 2131351028, %v150
    %v157 = vor.u32 %v155, %v156
    %v158 = vshll.u32 2131351028, %v149
    %v159 = vshrl.u32 2102212464, %v150
    %v160 = vor.u32 %v158, %v159
    %v161 = vshll.u32 2102212464, %v149
    %v162 = vshrl.u32 920167782, %v150
    %v163 = vor.u32 %v161, %v162
    %v164 = vshll.u32 920167782, %v149
    %v165 = vshrl.u32 1326507024, %v150
    %v166 = vor.u32 %v164, %v165
    %vm167 = vcmp.lt.s32.totalorder %v148, 1
    %vm168 = vcmp.lt.s32.totalorder %v148, 2
    %vm169 = vcmp.lt.s32.totalorder %v148, 3
    %vm170 = vcmp.lt.s32.totalorder %v148, 4
    %v171 = vsel %vm167, %v151, %v154
    %v172 = vsel %vm170, %v160, 2102212464
    %v173 = vsel %vm169, %v157, %v172
    %v174 = vsel %vm168, %v171, %v173
    %v175 = vsel %vm167, %v154, %v157
    %v176 = vsel %vm170, %v163, 920167782
    %v177 = vsel %vm169, %v160, %v176
    %v178 = vsel %vm168, %v175, %v177
    %v179 = vsel %vm167, %v157, %v160
    %v180 = vsel %vm170, %v166, 1326507024
    %v181 = vsel %vm169, %v163, %v180
    %v182 = vsel %vm168, %v179, %v181
    %v183 = vshll.u32 %v143, 8
    %v184 = vmul.u32.u64.compose %v183, %v182
    %v185 = vextract.low.u32 %v184
    %v186 = vextract.high.u32 %v184
    %v187 = vmul.u32.u64.compose %v183, %v178
    %v188 = vextract.low.u32 %v187
    %v189 = vextract.high.u32 %v187
    %v190 = vmul.u32 %v183, %v174
    %v191 = vadd.s32 %v186, %v188
    %vm192 = vc.u32 %v186, %v188
    %v193 = vadd.s32 %v189, 1
    %v194 = vsel %vm192, %v193, %v189
    %v195 = vadd.s32 %v190, %v194
    %v196 = vadd.s32 %v195, 536870912
    %v197 = vshrl.u32 %v196, 30
    %v198 = vshll.u32 %v197, 30
    %v199 = vsub.s32 %v195, %v198
    %vm200 = vcmp.lt.s32.totalorder %v199, 0
    %v201 = vsub.s32 0, %v199
    %v202 = vsel %vm200, %v201, %v199
    %v203 = vclz %v202
    %v204 = vsub.s32 %v203, 2
    %vm205 = vcmp.gt.s32.totalorder 0, %v204
    %v206 = vsel %vm205, 0, %v204
    %v207 = vsub.s32 32, %v206
    %v208 = vshll.u32 %v199, %v206
    %v209 = vshrl.u32 %v191, %v207
    %v210 = vor.u32 %v208, %v209
    %v211 = vsub.s32 4294967266, %v206
    %v212 = vadd.s32 %v211, 127
    %v213 = vshll.u32 %v212, 23
    %v214 = vor.u32 4788187, %v213
    %v215 = vand.u32 2147483647, %v214
    %v217 = vcvt.s32.f32 %v210
    %v218 = vmul.f32 %v217, %v215
    %v219 = vxor.u32 %v218, 2147483648
    %v220 = vsel %vm137, %v219, %v218
    %v221 = vsub.s32 4, %v197
    %v222 = vsel %vm137, %v221, %v197
    %v223 = vsel %vm136, %v29, %v220
    %v224 = vsel %vm136, 0, %v222
    %v225 = vcosq.f32.pop %v223
    %v226 = vsinq.f32.pop %v223
    %vm227 = vweird.f32 %v29
    %v228 = vadd.s32 %v224, 3
    %v229 = vand.u32 %v228, 3
    %vm230 = vcmp.lt.s32.totalorder %v229, 2
    %vm231 = vcmp.eq.s32.totalorder %v229, 0
    %v232 = vxor.u32 %v226, 2147483648
    %v233 = vsel %vm231, %v225, %v232
    %vm234 = vcmp.eq.s32.totalorder %v229, 2
    %v235 = vxor.u32 %v225, 2147483648
    %v236 = vsel %vm234, %v235, %v226
    %v237 = vsel %vm230, %v233, %v236
    %v238 = vsel %vm227, nan, %v237
    %v239 = vmul.f32 %v133, %v238
    %v240 = vlaneseq
    %v241 = vand.u32 %v240, 127
    %vm242 = vcmp.eq.s32.totalorder %v241, 0
    %vm243 = vcmp.eq.s32.totalorder %v241, 1
    %vm244 = vcmp.eq.s32.totalorder %v241, 2
    %v245 = vstv %s27
    %v246 = vsel %vm244, %v245, 0.0
    %v247 = vsel %vm243, %v239, %v246
    %v248 = vsel %vm242, %v134, %v247
    %249 = vst [vmem:[#allocation5] sm:$0x1] %v248
    // Predicated region
    $region10: #{tpu_custom_call.1} parent=1 // pred_check
      _
    $region11: #{tpu_custom_call.1} parent=1 // pred_check_branch
      %251 = sbr.rel (0) target = $region13
    $region12: #{tpu_custom_call.1} parent=1 // pred_region
      %s253 = ssub.s32 16, 16
      %254 = vsyncadd [#allocation3], %s253
      %s256 = sshll.u32 [#allocation5], 4
      %s257 = int_to_ptr.vmem [resolvable:$true] %s256
      %259 = dma.vmem_to_hbm [thread:$0]  %s257, 16, %s1, [#allocation3]
    $region13: #{tpu_custom_call.1} parent=1 // pred_fallthru
      _
    // Predicated region
    $region14: #{tpu_custom_call.1} parent=1 // pred_check
      _
    $region15: #{tpu_custom_call.1} parent=1 // pred_check_branch
      %261 = sbr.rel (0) target = $region17
    $region16: #{tpu_custom_call.1} parent=1 // pred_region
      %262 = dma.done [#allocation3], 16
    $region17: #{tpu_custom_call.1} parent=1 // pred_fallthru
      _
    %263 = vsyncpa [#allocation3], 1
    %264 = vsyncpa [#allocation4], 1

</llo_original>
